<compile_context>
chip_gen: v7x
topology: tpu7x:2x2x1
jax: 0.10.0
libtpu: 0.0.40
codegen_flags: <defaults>
</compile_context>

<pallas_src>
import math

import jax
import jax.numpy as jnp
from jax.experimental import pallas as pl
from jax.experimental.pallas import tpu as pltpu


def _round_up(n, m):
    return ((n + m - 1) // m) * m


def _qnet_kernel(x_ref, w1_ref, b1_ref, w2_ref, b2_ref, w3_ref, b3_ref, o_ref):
    # fc1 + ReLU.  K = state_dims (5) is tiny; leaving it on the MXU is fine --
    # fc2/fc3 dominate FLOPs and Mosaic masks the under-filled K internally.
    h1 = jnp.dot(x_ref[...], w1_ref[...], preferred_element_type=jnp.float32)
    h1 = jnp.maximum(h1 + b1_ref[...], 0.0)
    # fc2 + ReLU (f32 accumulate; operands may be bf16 when use_bf16=True).
    h2 = jnp.dot(h1.astype(w2_ref.dtype), w2_ref[...],
                 preferred_element_type=jnp.float32)
    h2 = jnp.maximum(h2 + b2_ref[...], 0.0)
    # out (no activation); store the true action_dims-wide block directly.
    y = jnp.dot(h2.astype(w3_ref.dtype), w3_ref[...],
                preferred_element_type=jnp.float32)
    o_ref[...] = (y + b3_ref[...]).astype(o_ref.dtype)


def _choose_tb(batch, tb_max):
    """Batch tile: multiple of 8, as large as tb_max, but small enough that the
    batch grid has >= 2 steps whenever the batch allows (keeps both v7x
    TensorCores busy via the "parallel" dimension semantics)."""
    b8 = _round_up(max(batch, 1), 8)
    half = _round_up(pl.cdiv(b8, 2), 8)
    return max(8, min(tb_max, half))


def qnetwork_forward(x, params, *, tb_max=2048, use_bf16=False):
    """Fused MLP forward. x: (B, state_dims) float32. Returns (B, action_dims) f32."""
    w1, b1, w2, b2, w3, b3 = params
    B, state_dims = x.shape
    hidden = w1.shape[1]
    action_dims = w3.shape[1]

    if use_bf16:
        # Optional MXU speedup on v6e/v7x; biases / accumulation stay f32.
        x = x.astype(jnp.bfloat16)
        w1 = w1.astype(jnp.bfloat16)
        w2 = w2.astype(jnp.bfloat16)
        w3 = w3.astype(jnp.bfloat16)

    tb = _choose_tb(B, tb_max)
    grid = (pl.cdiv(B, tb),)

    out = pl.pallas_call(
        _qnet_kernel,
        out_shape=jax.ShapeDtypeStruct((B, action_dims), jnp.float32),
        grid=grid,
        in_specs=[
            # batch-tiled input, pipelined across grid steps (ragged last block
            # is handled by Pallas; garbage rows never reach HBM).
            pl.BlockSpec((tb, state_dims), lambda i: (i, 0)),
            # weights / biases: constant block index -> loaded once, VMEM resident
            pl.BlockSpec((state_dims, hidden), lambda i: (0, 0)),
            pl.BlockSpec((1, hidden), lambda i: (0, 0)),
            pl.BlockSpec((hidden, hidden), lambda i: (0, 0)),
            pl.BlockSpec((1, hidden), lambda i: (0, 0)),
            pl.BlockSpec((hidden, action_dims), lambda i: (0, 0)),
            pl.BlockSpec((1, action_dims), lambda i: (0, 0)),
        ],
        out_specs=pl.BlockSpec((tb, action_dims), lambda i: (i, 0)),
        compiler_params=pltpu.CompilerParams(
            dimension_semantics=("parallel",),
        ),
    )(x, w1, b1, w2, b2, w3, b3)
    return out


def init_params(key, state_dims=5, action_dims=6, hidden_dims=128):
    """Deterministic init mimicking PyTorch nn.Linear default:
    U(-1/sqrt(fan_in), 1/sqrt(fan_in)) for both weights and biases.
    Weights stored (in, out) so the kernel computes y = x @ W + b."""
    def linear(k, fan_in, fan_out):
        kw, kb = jax.random.split(k)
        bound = 1.0 / math.sqrt(fan_in)
        w = jax.random.uniform(kw, (fan_in, fan_out), jnp.float32, -bound, bound)
        b = jax.random.uniform(kb, (1, fan_out), jnp.float32, -bound, bound)
        return w, b

    k1, k2, k3 = jax.random.split(key, 3)
    w1, b1 = linear(k1, state_dims, hidden_dims)
    w2, b2 = linear(k2, hidden_dims, hidden_dims)
    w3, b3 = linear(k3, hidden_dims, action_dims)
    return (w1, b1, w2, b2, w3, b3)


def reference_forward(x, params):
    w1, b1, w2, b2, w3, b3 = params
    h = jnp.maximum(x @ w1 + b1, 0.0)
    h = jnp.maximum(h @ w2 + b2, 0.0)
    return h @ w3 + b3


if __name__ == "__main__":
    key = jax.random.PRNGKey(0)
    k_params, k_x1, k_x2 = jax.random.split(key, 3)

    state_dims, action_dims, hidden_dims = 5, 6, 128
    params = init_params(k_params, state_dims, action_dims, hidden_dims)

    # Small batch: single grid step, partial-lane output block.
    x_small = jax.random.normal(k_x1, (8, state_dims), dtype=jnp.float32)
    out_small = jax.block_until_ready(qnetwork_forward(x_small, params))
    ref_small = reference_forward(x_small, params)
    assert out_small.shape == (8, action_dims)
    assert jnp.allclose(out_small, ref_small, atol=1e-4, rtol=1e-4)

    # Larger batch, not a multiple of the tile: exercises the 2-step grid and
    # the masked ragged last batch block (no wrapper padding/slicing).
    x_big = jax.random.normal(k_x2, (300, state_dims), dtype=jnp.float32)
    out_big = jax.block_until_ready(qnetwork_forward(x_big, params))
    ref_big = reference_forward(x_big, params)
    assert out_big.shape == (300, action_dims)
    assert jnp.allclose(out_big, ref_big, atol=1e-4, rtol=1e-4)

    # Optional bf16-operand path (MXU win on v6e/v7x); looser tolerance.
    out_bf16 = jax.block_until_ready(
        qnetwork_forward(x_big, params, use_bf16=True))
    assert out_bf16.shape == (300, action_dims)
    assert jnp.allclose(out_bf16, ref_big, atol=5e-2, rtol=5e-2)

    print("KERNEL_OK")
</pallas_src>

<mosaic_0001>
module attributes {stable_mosaic.version = 11 : i64} {
  func.func @_qnet_kernel(%arg0: i32, %arg1: memref<8x5xf32, #tpu.memory_space<vmem>>, %arg2: memref<5x128xf32, #tpu.memory_space<vmem>>, %arg3: memref<1x128xf32, #tpu.memory_space<vmem>>, %arg4: memref<128x128xf32, #tpu.memory_space<vmem>>, %arg5: memref<1x128xf32, #tpu.memory_space<vmem>>, %arg6: memref<128x6xf32, #tpu.memory_space<vmem>>, %arg7: memref<1x6xf32, #tpu.memory_space<vmem>>, %arg8: memref<8x6xf32, #tpu.memory_space<vmem>>) attributes {dimension_semantics = [#tpu.dimension_semantics<parallel>], iteration_bounds = array<i64: 1>, scalar_prefetch = 0 : i64, scratch_operands = 0 : i64, tpu.core_type = #tpu.core_type<tc>, window_params = [{transform_indices = @transform_0, window_bounds = array<i64: 8, 5>}, {pipeline_mode = #tpu.pipeline_mode<synchronous>, transform_indices = @transform_1, window_bounds = array<i64: 5, 128>}, {pipeline_mode = #tpu.pipeline_mode<synchronous>, transform_indices = @transform_2, window_bounds = array<i64: 1, 128>}, {pipeline_mode = #tpu.pipeline_mode<synchronous>, transform_indices = @transform_3, window_bounds = array<i64: 128, 128>}, {pipeline_mode = #tpu.pipeline_mode<synchronous>, transform_indices = @transform_4, window_bounds = array<i64: 1, 128>}, {pipeline_mode = #tpu.pipeline_mode<synchronous>, transform_indices = @transform_5, window_bounds = array<i64: 128, 6>}, {pipeline_mode = #tpu.pipeline_mode<synchronous>, transform_indices = @transform_6, window_bounds = array<i64: 1, 6>}, {transform_indices = @transform_7, window_bounds = array<i64: 8, 6>}]} {
    %c0 = arith.constant 0 : index
    %c0_0 = arith.constant 0 : index
    %0 = vector.load %arg1[%c0, %c0_0] : memref<8x5xf32, #tpu.memory_space<vmem>>, vector<8x5xf32>
    %c0_1 = arith.constant 0 : index
    %c0_2 = arith.constant 0 : index
    %1 = vector.load %arg2[%c0_1, %c0_2] : memref<5x128xf32, #tpu.memory_space<vmem>>, vector<5x128xf32>
    %cst = arith.constant dense<0.000000e+00> : vector<8x128xf32>
    %2 = tpu.matmul %0, %1, %cst {dimension_numbers = #tpu.dot_dimension_numbers<[1], [0], [0], [1], [0, 0, 1, 1], [], []>} : vector<8x5xf32>, vector<5x128xf32>, vector<8x128xf32> -> vector<8x128xf32>
    %c0_3 = arith.constant 0 : index
    %c0_4 = arith.constant 0 : index
    %3 = vector.load %arg3[%c0_3, %c0_4] : memref<1x128xf32, #tpu.memory_space<vmem>>, vector<1x128xf32>
    %4 = vector.broadcast %3 : vector<1x128xf32> to vector<8x128xf32>
    %5 = arith.addf %2, %4 : vector<8x128xf32>
    %cst_5 = arith.constant 0.000000e+00 : f32
    %6 = vector.broadcast %cst_5 : f32 to vector<8x128xf32>
    %7 = arith.maximumf %5, %6 : vector<8x128xf32>
    %c0_6 = arith.constant 0 : index
    %c0_7 = arith.constant 0 : index
    %8 = vector.load %arg4[%c0_6, %c0_7] : memref<128x128xf32, #tpu.memory_space<vmem>>, vector<128x128xf32>
    %cst_8 = arith.constant dense<0.000000e+00> : vector<8x128xf32>
    %9 = tpu.matmul %7, %8, %cst_8 {dimension_numbers = #tpu.dot_dimension_numbers<[1], [0], [0], [1], [0, 0, 1, 1], [], []>} : vector<8x128xf32>, vector<128x128xf32>, vector<8x128xf32> -> vector<8x128xf32>
    %c0_9 = arith.constant 0 : index
    %c0_10 = arith.constant 0 : index
    %10 = vector.load %arg5[%c0_9, %c0_10] : memref<1x128xf32, #tpu.memory_space<vmem>>, vector<1x128xf32>
    %11 = vector.broadcast %10 : vector<1x128xf32> to vector<8x128xf32>
    %12 = arith.addf %9, %11 : vector<8x128xf32>
    %cst_11 = arith.constant 0.000000e+00 : f32
    %13 = vector.broadcast %cst_11 : f32 to vector<8x128xf32>
    %14 = arith.maximumf %12, %13 : vector<8x128xf32>
    %c0_12 = arith.constant 0 : index
    %c0_13 = arith.constant 0 : index
    %15 = vector.load %arg6[%c0_12, %c0_13] : memref<128x6xf32, #tpu.memory_space<vmem>>, vector<128x6xf32>
    %cst_14 = arith.constant dense<0.000000e+00> : vector<8x6xf32>
    %16 = tpu.matmul %14, %15, %cst_14 {dimension_numbers = #tpu.dot_dimension_numbers<[1], [0], [0], [1], [0, 0, 1, 1], [], []>} : vector<8x128xf32>, vector<128x6xf32>, vector<8x6xf32> -> vector<8x6xf32>
    %c0_15 = arith.constant 0 : index
    %c0_16 = arith.constant 0 : index
    %17 = vector.load %arg7[%c0_15, %c0_16] : memref<1x6xf32, #tpu.memory_space<vmem>>, vector<1x6xf32>
    %18 = vector.broadcast %17 : vector<1x6xf32> to vector<8x6xf32>
    %19 = arith.addf %16, %18 : vector<8x6xf32>
    %c0_17 = arith.constant 0 : index
    %c0_18 = arith.constant 0 : index
    %20 = vector.load %arg8[%c0_17, %c0_18] : memref<8x6xf32, #tpu.memory_space<vmem>>, vector<8x6xf32>
    tpu.vector_store %arg8[%c0_17, %c0_18], %19 {strides = array<i32>} : memref<8x6xf32, #tpu.memory_space<vmem>>, vector<8x6xf32>,
    return
  }
  func.func @transform_0(%arg0: i32) -> (i32, i32) {
    %c0_i32 = arith.constant 0 : i32
    %c0_i32_0 = arith.constant 0 : i32
    return %arg0, %c0_i32 : i32, i32
  }
  func.func @transform_1(%arg0: i32) -> (i32, i32) {
    %c0_i32 = arith.constant 0 : i32
    %c0_i32_0 = arith.constant 0 : i32
    %c0_i32_1 = arith.constant 0 : i32
    return %c0_i32, %c0_i32_0 : i32, i32
  }
  func.func @transform_2(%arg0: i32) -> (i32, i32) {
    %c0_i32 = arith.constant 0 : i32
    %c0_i32_0 = arith.constant 0 : i32
    %c0_i32_1 = arith.constant 0 : i32
    return %c0_i32, %c0_i32_0 : i32, i32
  }
  func.func @transform_3(%arg0: i32) -> (i32, i32) {
    %c0_i32 = arith.constant 0 : i32
    %c0_i32_0 = arith.constant 0 : i32
    %c0_i32_1 = arith.constant 0 : i32
    return %c0_i32, %c0_i32_0 : i32, i32
  }
  func.func @transform_4(%arg0: i32) -> (i32, i32) {
    %c0_i32 = arith.constant 0 : i32
    %c0_i32_0 = arith.constant 0 : i32
    %c0_i32_1 = arith.constant 0 : i32
    return %c0_i32, %c0_i32_0 : i32, i32
  }
  func.func @transform_5(%arg0: i32) -> (i32, i32) {
    %c0_i32 = arith.constant 0 : i32
    %c0_i32_0 = arith.constant 0 : i32
    %c0_i32_1 = arith.constant 0 : i32
    return %c0_i32, %c0_i32_0 : i32, i32
  }
  func.func @transform_6(%arg0: i32) -> (i32, i32) {
    %c0_i32 = arith.constant 0 : i32
    %c0_i32_0 = arith.constant 0 : i32
    %c0_i32_1 = arith.constant 0 : i32
    return %c0_i32, %c0_i32_0 : i32, i32
  }
  func.func @transform_7(%arg0: i32) -> (i32, i32) {
    %c0_i32 = arith.constant 0 : i32
    %c0_i32_0 = arith.constant 0 : i32
    return %arg0, %c0_i32 : i32, i32
  }
}

</mosaic_0001>

<llo_original>
// kernel: tpu_custom_call.1
$region0: #{tpu_custom_call.1}
  #allocation0 [shape = 'u32[]', space=smem, size = 0x4, offset = 0x4, fixed_abs, tag = 'smem constant byte address 0x4 - core index']
  #allocation1 [shape = 'u32[144,128]{1,0:T(1,128)}', space=vmem, size = 0x12000, scoped, tag = 'internal scratch']
  %s0 = inlined_call_operand.vmem [shape: f32[8,5], index: 0, kind: input, shape index: {}]
  %s1 = inlined_call_operand.hbm [shape: f32[5,128], index: 1, kind: input, shape index: {}]
  %s2 = inlined_call_operand.vmem [shape: f32[1,128], index: 2, kind: input, shape index: {}]
  %s3 = inlined_call_operand.vmem [shape: f32[128,128], index: 3, kind: input, shape index: {}]
  %s4 = inlined_call_operand.vmem [shape: f32[1,128], index: 4, kind: input, shape index: {}]
  %s5 = inlined_call_operand.vmem [shape: f32[128,6], index: 5, kind: input, shape index: {}]
  %s6 = inlined_call_operand.vmem [shape: f32[1,6], index: 6, kind: input, shape index: {}]
  %s7 = inlined_call_operand.hbm [shape: f32[8,6], index: 7, kind: output, shape index: {}]
  %s8 = sld [smem:[#allocation0]]
  $region42: #{tpu_custom_call.1} parent=0
    _
  %s10 = ssub.s32 1, %s8
  %s11 = scalar_select 0, %s10, %s8
  $region1: #{tpu_custom_call.1} parent=0
    #allocation2 [shape = 'u8[4096]{0}', space=vmem, size = 0x1000, scoped, tag = 'input window, operand 1, single buffered']
    #allocation3 [shape = 's32[1]{0}', space=sflag, size = 0x4, scoped, tag = 'scoped memory for tpu_custom_call.1']
    #allocation4 [shape = 's32[1]{0}', space=sflag, size = 0x4, scoped, tag = 'scoped memory for tpu_custom_call.1']
    #allocation5 [shape = 'u8[4096]{0}', space=vmem, size = 0x1000, scoped, tag = 'output window, operand 0, single buffered']
    %12 = vsyncpa [#allocation3], 0
    %13 = vsyncpa [#allocation4], 0
    // Predicated region
    $region2: #{tpu_custom_call.1} parent=1 // pred_check
      _
    $region3: #{tpu_custom_call.1} parent=1 // pred_check_branch
      %15 = sbr.rel (0) target = $region5
    $region4: #{tpu_custom_call.1} parent=1 // pred_region
      _
    $region5: #{tpu_custom_call.1} parent=1 // pred_fallthru
      _
    // Predicated region
    $region6: #{tpu_custom_call.1} parent=1 // pred_check
      _
    $region7: #{tpu_custom_call.1} parent=1 // pred_check_branch
      %17 = sbr.rel (0) target = $region9
    $region8: #{tpu_custom_call.1} parent=1 // pred_region
      %s19 = ssub.s32 128, 128
      %20 = vsyncadd [#allocation3], %s19
      %s22 = sshll.u32 [#allocation2], 4
      %s23 = int_to_ptr.vmem [resolvable:$true] %s22
      %25 = dma.hbm_to_vmem [thread:$0]  %s1, 128, %s23, [#allocation3]
    $region9: #{tpu_custom_call.1} parent=1 // pred_fallthru
      _
    // Predicated region
    $region10: #{tpu_custom_call.1} parent=1 // pred_check
      _
    $region11: #{tpu_custom_call.1} parent=1 // pred_check_branch
      %27 = sbr.rel (0) target = $region13
    $region12: #{tpu_custom_call.1} parent=1 // pred_region
      _
    $region13: #{tpu_custom_call.1} parent=1 // pred_fallthru
      _
    // Predicated region
    $region14: #{tpu_custom_call.1} parent=1 // pred_check
      _
    $region15: #{tpu_custom_call.1} parent=1 // pred_check_branch
      %29 = sbr.rel (0) target = $region17
    $region16: #{tpu_custom_call.1} parent=1 // pred_region
      _
    $region17: #{tpu_custom_call.1} parent=1 // pred_fallthru
      _
    // Predicated region
    $region18: #{tpu_custom_call.1} parent=1 // pred_check
      _
    $region19: #{tpu_custom_call.1} parent=1 // pred_check_branch
      %31 = sbr.rel (0) target = $region21
    $region20: #{tpu_custom_call.1} parent=1 // pred_region
      _
    $region21: #{tpu_custom_call.1} parent=1 // pred_fallthru
      _
    // Predicated region
    $region22: #{tpu_custom_call.1} parent=1 // pred_check
      _
    $region23: #{tpu_custom_call.1} parent=1 // pred_check_branch
      %33 = sbr.rel (0) target = $region25
    $region24: #{tpu_custom_call.1} parent=1 // pred_region
      _
    $region25: #{tpu_custom_call.1} parent=1 // pred_fallthru
      _
    // Predicated region
    $region26: #{tpu_custom_call.1} parent=1 // pred_check
      _
    $region27: #{tpu_custom_call.1} parent=1 // pred_check_branch
      %35 = sbr.rel (0) target = $region29
    $region28: #{tpu_custom_call.1} parent=1 // pred_region
      _
    $region29: #{tpu_custom_call.1} parent=1 // pred_fallthru
      _
    // Predicated region
    $region30: #{tpu_custom_call.1} parent=1 // pred_check
      _
    $region31: #{tpu_custom_call.1} parent=1 // pred_check_branch
      %37 = sbr.rel (0) target = $region33
    $region32: #{tpu_custom_call.1} parent=1 // pred_region
      %38 = dma.done [#allocation3], 128
    $region33: #{tpu_custom_call.1} parent=1 // pred_fallthru
      _
    %v39 = vld [vmem:[%s0] sm:$0xff]
    %v40 = vld [vmem:[#allocation2] sm:$0x1f]
    %v41 = vld [vmem:[%s2] sm:$0x1]
    %v43 = vlaneseq
    %v44 = vshrl.u32 %v43, 7
    %v45 = vsub.s32 0, %v44
    %v46 = vrot.slane %v41, %v45
    %vm48 = vcmask 39936
    %v50 = vsel %vm48, %v39, 0
    %vm52 = vcmask 1044480
    %v54 = vsel %vm52, %v40, 0
    %56 = vmatprep.subr.mxu0 0.0
    %57 = vmatpush1.msra.mxu0 %v54
    %58 = vmatprep.subr.mxu0 0.0
    %59 = vmatpush1.msra.mxu0 0.0
    %60 = vmatprep.subr.mxu0 0.0
    %61 = vmatpush1.msra.mxu0 0.0
    %62 = vmatprep.subr.mxu0 0.0
    %63 = vmatpush1.msra.mxu0 0.0
    %64 = vmatprep.subr.mxu0 0.0
    %65 = vmatpush1.msra.mxu0 0.0
    %66 = vmatprep.subr.mxu0 0.0
    %67 = vmatpush1.msra.mxu0 0.0
    %68 = vmatprep.subr.mxu0 0.0
    %69 = vmatpush1.msra.mxu0 0.0
    %70 = vmatprep.subr.mxu0 0.0
    %71 = vmatpush1.msra.mxu0 0.0
    %72 = vmatprep.subr.mxu0 0.0
    %73 = vmatpush1.msra.mxu0 0.0
    %74 = vmatprep.subr.mxu0 0.0
    %75 = vmatpush1.msra.mxu0 0.0
    %76 = vmatprep.subr.mxu0 0.0
    %77 = vmatpush1.msra.mxu0 0.0
    %78 = vmatprep.subr.mxu0 0.0
    %79 = vmatpush1.msra.mxu0 0.0
    %80 = vmatprep.subr.mxu0 0.0
    %81 = vmatpush1.msra.mxu0 0.0
    %82 = vmatprep.subr.mxu0 0.0
    %83 = vmatpush1.msra.mxu0 0.0
    %84 = vmatprep.subr.mxu0 0.0
    %85 = vmatpush1.msra.mxu0 0.0
    %86 = vmatprep.subr.mxu0 0.0
    %87 = vmatpush1.msra.mxu0 0.0
    %88 = vmatprep.subr.mxu0 0.0
    %89 = vmatpush1.msra.mxu0 0.0
    %90 = vmatprep.subr.mxu0 0.0
    %91 = vmatpush1.msra.mxu0 0.0
    %92 = vmatprep.subr.mxu0 0.0
    %93 = vmatpush1.msra.mxu0 0.0
    %94 = vmatprep.subr.mxu0 0.0
    %95 = vmatpush1.msra.mxu0 0.0
    %96 = vmatprep.subr.mxu0 0.0
    %97 = vmatpush1.msra.mxu0 0.0
    %98 = vmatprep.subr.mxu0 0.0
    %99 = vmatpush1.msra.mxu0 0.0
    %100 = vmatprep.subr.mxu0 0.0
    %101 = vmatpush1.msra.mxu0 0.0
    %102 = vmatprep.subr.mxu0 0.0
    %103 = vmatpush1.msra.mxu0 0.0
    %104 = vmatprep.subr.mxu0 0.0
    %105 = vmatpush1.msra.mxu0 0.0
    %106 = vmatprep.subr.mxu0 0.0
    %107 = vmatpush1.msra.mxu0 0.0
    %108 = vmatprep.subr.mxu0 0.0
    %109 = vmatpush1.msra.mxu0 0.0
    %110 = vmatprep.subr.mxu0 0.0
    %111 = vmatpush1.msra.mxu0 0.0
    %112 = vmatprep.subr.mxu0 0.0
    %113 = vmatpush1.msra.mxu0 0.0
    %114 = vmatprep.subr.mxu0 0.0
    %115 = vmatpush1.msra.mxu0 0.0
    %116 = vmatprep.subr.mxu0 0.0
    %117 = vmatpush1.msra.mxu0 0.0
    %118 = vmatprep.subr.mxu0 0.0
    %119 = vmatpush1.msra.mxu0 0.0
    %120 = vmatprep.mubr.f32.mxu0 0.0
    %121 = vmatmul.mubr.f32.gmra.mrb[0].mxu0 %v50
    %v122 = vpop.f32.mrb[0].mxu0
    %v123 = vadd.f32 %v46, %v122
    %v124 = vpop.f32.mrb[0].mxu0
    %125 = vdwg.mxu0
    %v126 = vmax.f32 %v123, 0.0
    %v127 = vld [vmem:[%s3] sm:$0xff]
    %v128 = vld [vmem:[%s3 + $0x8] sm:$0xff]
    %v129 = vld [vmem:[%s3 + $0x10] sm:$0xff]
    %v130 = vld [vmem:[%s3 + $0x18] sm:$0xff]
    %v131 = vld [vmem:[%s3 + $0x20] sm:$0xff]
    %v132 = vld [vmem:[%s3 + $0x28] sm:$0xff]
    %v133 = vld [vmem:[%s3 + $0x30] sm:$0xff]
    %v134 = vld [vmem:[%s3 + $0x38] sm:$0xff]
    %v135 = vld [vmem:[%s3 + $0x40] sm:$0xff]
    %v136 = vld [vmem:[%s3 + $0x48] sm:$0xff]
    %v137 = vld [vmem:[%s3 + $0x50] sm:$0xff]
    %v138 = vld [vmem:[%s3 + $0x58] sm:$0xff]
    %v139 = vld [vmem:[%s3 + $0x60] sm:$0xff]
    %v140 = vld [vmem:[%s3 + $0x68] sm:$0xff]
    %v141 = vld [vmem:[%s3 + $0x70] sm:$0xff]
    %v142 = vld [vmem:[%s3 + $0x78] sm:$0xff]
    %v143 = vld [vmem:[%s4] sm:$0x1]
    %v145 = vlaneseq
    %v146 = vshrl.u32 %v145, 7
    %v147 = vsub.s32 0, %v146
    %v148 = vrot.slane %v143, %v147
    %150 = vmatprep.subr.mxu0 0.0
    %151 = vmatpush1.msra.mxu0 %v127
    %152 = vmatprep.subr.mxu0 0.0
    %153 = vmatpush1.msra.mxu0 %v128
    %154 = vmatprep.subr.mxu0 0.0
    %155 = vmatpush1.msra.mxu0 %v129
    %156 = vmatprep.subr.mxu0 0.0
    %157 = vmatpush1.msra.mxu0 %v130
    %158 = vmatprep.subr.mxu0 0.0
    %159 = vmatpush1.msra.mxu0 %v131
    %160 = vmatprep.subr.mxu0 0.0
    %161 = vmatpush1.msra.mxu0 %v132
    %162 = vmatprep.subr.mxu0 0.0
    %163 = vmatpush1.msra.mxu0 %v133
    %164 = vmatprep.subr.mxu0 0.0
    %165 = vmatpush1.msra.mxu0 %v134
    %166 = vmatprep.subr.mxu0 0.0
    %167 = vmatpush1.msra.mxu0 %v135
    %168 = vmatprep.subr.mxu0 0.0
    %169 = vmatpush1.msra.mxu0 %v136
    %170 = vmatprep.subr.mxu0 0.0
    %171 = vmatpush1.msra.mxu0 %v137
    %172 = vmatprep.subr.mxu0 0.0
    %173 = vmatpush1.msra.mxu0 %v138
    %174 = vmatprep.subr.mxu0 0.0
    %175 = vmatpush1.msra.mxu0 %v139
    %176 = vmatprep.subr.mxu0 0.0
    %177 = vmatpush1.msra.mxu0 %v140
    %178 = vmatprep.subr.mxu0 0.0
    %179 = vmatpush1.msra.mxu0 %v141
    %180 = vmatprep.subr.mxu0 0.0
    %181 = vmatpush1.msra.mxu0 %v142
    %182 = vmatprep.subr.mxu0 0.0
    %183 = vmatpush1.msra.mxu0 0.0
    %184 = vmatprep.subr.mxu0 0.0
    %185 = vmatpush1.msra.mxu0 0.0
    %186 = vmatprep.subr.mxu0 0.0
    %187 = vmatpush1.msra.mxu0 0.0
    %188 = vmatprep.subr.mxu0 0.0
    %189 = vmatpush1.msra.mxu0 0.0
    %190 = vmatprep.subr.mxu0 0.0
    %191 = vmatpush1.msra.mxu0 0.0
    %192 = vmatprep.subr.mxu0 0.0
    %193 = vmatpush1.msra.mxu0 0.0
    %194 = vmatprep.subr.mxu0 0.0
    %195 = vmatpush1.msra.mxu0 0.0
    %196 = vmatprep.subr.mxu0 0.0
    %197 = vmatpush1.msra.mxu0 0.0
    %198 = vmatprep.subr.mxu0 0.0
    %199 = vmatpush1.msra.mxu0 0.0
    %200 = vmatprep.subr.mxu0 0.0
    %201 = vmatpush1.msra.mxu0 0.0
    %202 = vmatprep.subr.mxu0 0.0
    %203 = vmatpush1.msra.mxu0 0.0
    %204 = vmatprep.subr.mxu0 0.0
    %205 = vmatpush1.msra.mxu0 0.0
    %206 = vmatprep.subr.mxu0 0.0
    %207 = vmatpush1.msra.mxu0 0.0
    %208 = vmatprep.subr.mxu0 0.0
    %209 = vmatpush1.msra.mxu0 0.0
    %210 = vmatprep.subr.mxu0 0.0
    %211 = vmatpush1.msra.mxu0 0.0
    %212 = vmatprep.subr.mxu0 0.0
    %213 = vmatpush1.msra.mxu0 0.0
    %214 = vmatprep.mubr.f32.mxu0 0.0
    %215 = vmatmul.mubr.f32.gmra.mrb[0].mxu0 %v126
    %v216 = vpop.f32.mrb[0].mxu0
    %v217 = vadd.f32 %v148, %v216
    %v218 = vpop.f32.mrb[0].mxu0
    %219 = vdwg.mxu0
    %v220 = vmax.f32 %v217, 0.0
    %v221 = vld [vmem:[%s5] sm:$0xff]
    %v222 = vld [vmem:[%s5 + $0x8] sm:$0xff]
    %v223 = vld [vmem:[%s5 + $0x10] sm:$0xff]
    %v224 = vld [vmem:[%s5 + $0x18] sm:$0xff]
    %v225 = vld [vmem:[%s5 + $0x20] sm:$0xff]
    %v226 = vld [vmem:[%s5 + $0x28] sm:$0xff]
    %v227 = vld [vmem:[%s5 + $0x30] sm:$0xff]
    %v228 = vld [vmem:[%s5 + $0x38] sm:$0xff]
    %v229 = vld [vmem:[%s5 + $0x40] sm:$0xff]
    %v230 = vld [vmem:[%s5 + $0x48] sm:$0xff]
    %v231 = vld [vmem:[%s5 + $0x50] sm:$0xff]
    %v232 = vld [vmem:[%s5 + $0x58] sm:$0xff]
    %v233 = vld [vmem:[%s5 + $0x60] sm:$0xff]
    %v234 = vld [vmem:[%s5 + $0x68] sm:$0xff]
    %v235 = vld [vmem:[%s5 + $0x70] sm:$0xff]
    %v236 = vld [vmem:[%s5 + $0x78] sm:$0xff]
    %v237 = vld [vmem:[%s6] sm:$0x1]
    %v239 = vlaneseq
    %v240 = vshrl.u32 %v239, 7
    %v241 = vsub.s32 0, %v240
    %v242 = vrot.slane %v237, %v241
    %244 = vmatprep.subr.mxu0 0.0
    %245 = vmatpush1.msra.mxu0 %v221
    %246 = vmatprep.subr.mxu0 0.0
    %247 = vmatpush1.msra.mxu0 %v222
    %248 = vmatprep.subr.mxu0 0.0
    %249 = vmatpush1.msra.mxu0 %v223
    %250 = vmatprep.subr.mxu0 0.0
    %251 = vmatpush1.msra.mxu0 %v224
    %252 = vmatprep.subr.mxu0 0.0
    %253 = vmatpush1.msra.mxu0 %v225
    %254 = vmatprep.subr.mxu0 0.0
    %255 = vmatpush1.msra.mxu0 %v226
    %256 = vmatprep.subr.mxu0 0.0
    %257 = vmatpush1.msra.mxu0 %v227
    %258 = vmatprep.subr.mxu0 0.0
    %259 = vmatpush1.msra.mxu0 %v228
    %260 = vmatprep.subr.mxu0 0.0
    %261 = vmatpush1.msra.mxu0 %v229
    %262 = vmatprep.subr.mxu0 0.0
    %263 = vmatpush1.msra.mxu0 %v230
    %264 = vmatprep.subr.mxu0 0.0
    %265 = vmatpush1.msra.mxu0 %v231
    %266 = vmatprep.subr.mxu0 0.0
    %267 = vmatpush1.msra.mxu0 %v232
    %268 = vmatprep.subr.mxu0 0.0
    %269 = vmatpush1.msra.mxu0 %v233
    %270 = vmatprep.subr.mxu0 0.0
    %271 = vmatpush1.msra.mxu0 %v234
    %272 = vmatprep.subr.mxu0 0.0
    %273 = vmatpush1.msra.mxu0 %v235
    %274 = vmatprep.subr.mxu0 0.0
    %275 = vmatpush1.msra.mxu0 %v236
    %276 = vmatprep.subr.mxu0 0.0
    %277 = vmatpush1.msra.mxu0 0.0
    %278 = vmatprep.subr.mxu0 0.0
    %279 = vmatpush1.msra.mxu0 0.0
    %280 = vmatprep.subr.mxu0 0.0
    %281 = vmatpush1.msra.mxu0 0.0
    %282 = vmatprep.subr.mxu0 0.0
    %283 = vmatpush1.msra.mxu0 0.0
    %284 = vmatprep.subr.mxu0 0.0
    %285 = vmatpush1.msra.mxu0 0.0
    %286 = vmatprep.subr.mxu0 0.0
    %287 = vmatpush1.msra.mxu0 0.0
    %288 = vmatprep.subr.mxu0 0.0
    %289 = vmatpush1.msra.mxu0 0.0
    %290 = vmatprep.subr.mxu0 0.0
    %291 = vmatpush1.msra.mxu0 0.0
    %292 = vmatprep.subr.mxu0 0.0
    %293 = vmatpush1.msra.mxu0 0.0
    %294 = vmatprep.subr.mxu0 0.0
    %295 = vmatpush1.msra.mxu0 0.0
    %296 = vmatprep.subr.mxu0 0.0
    %297 = vmatpush1.msra.mxu0 0.0
    %298 = vmatprep.subr.mxu0 0.0
    %299 = vmatpush1.msra.mxu0 0.0
    %300 = vmatprep.subr.mxu0 0.0
    %301 = vmatpush1.msra.mxu0 0.0
    %302 = vmatprep.subr.mxu0 0.0
    %303 = vmatpush1.msra.mxu0 0.0
    %304 = vmatprep.subr.mxu0 0.0
    %305 = vmatpush1.msra.mxu0 0.0
    %306 = vmatprep.subr.mxu0 0.0
    %307 = vmatpush1.msra.mxu0 0.0
    %308 = vmatprep.mubr.f32.mxu0 0.0
    %309 = vmatmul.mubr.f32.gmra.mrb[0].mxu0 %v220
    %v310 = vpop.f32.mrb[0].mxu0
    %v311 = vadd.f32 %v242, %v310
    %v312 = vpop.f32.mrb[0].mxu0
    %313 = vdwg.mxu0
    %vm314 = vcmask 48128
    %315 = vst.msk [vmem:[#allocation5] sm:$0xff] %vm314, %v311
    // Predicated region
    $region34: #{tpu_custom_call.1} parent=1 // pred_check
      _
    $region35: #{tpu_custom_call.1} parent=1 // pred_check_branch
      %317 = sbr.rel (0) target = $region37
    $region36: #{tpu_custom_call.1} parent=1 // pred_region
      %s319 = ssub.s32 128, 128
      %320 = vsyncadd [#allocation4], %s319
      %s322 = sshll.u32 [#allocation5], 4
      %s323 = int_to_ptr.vmem [resolvable:$true] %s322
      %325 = dma.vmem_to_hbm [thread:$0]  %s323, 128, %s7, [#allocation4]
    $region37: #{tpu_custom_call.1} parent=1 // pred_fallthru
      _
    // Predicated region
    $region38: #{tpu_custom_call.1} parent=1 // pred_check
      _
    $region39: #{tpu_custom_call.1} parent=1 // pred_check_branch
      %327 = sbr.rel (0) target = $region41
    $region40: #{tpu_custom_call.1} parent=1 // pred_region
      %328 = dma.done [#allocation4], 128
    $region41: #{tpu_custom_call.1} parent=1 // pred_fallthru
      _
    %329 = vsyncpa [#allocation3], 1
    %330 = vsyncpa [#allocation4], 1

</llo_original>
